<compile_context>
chip_gen: v7x
topology: tpu7x:2x2x1
jax: 0.10.0
libtpu: 0.0.40
codegen_flags: <defaults>
</compile_context>

<pallas_src>
import functools

import jax
import jax.numpy as jnp
from jax.experimental import pallas as pl
from jax.experimental.pallas import tpu as pltpu


def _vmem_spec():
    return pl.BlockSpec(memory_space=pltpu.MemorySpace.VMEM)


def fused_cnn_kernel(x_ref, w_ref, b_ref, mask_ref, *rest,
                     B, T, max_fs, num_fc, compute_dtype):
    """Fused packed-Conv2d branches + bias + ReLU + masked max-pool + FC stack.

    x_ref    : (B*T + max_fs - 1, E)  flattened, zero-padded embedded input
    w_ref    : (max_fs, E, C_total)   all conv branches packed along channels
    b_ref    : (1, C_total)           packed conv biases
    mask_ref : (T, C_total)           1.0 where a window start is valid for the
                                      channel's branch, else 0.0
    rest     : W_0, c_0, ..., W_{num_fc-1}, c_{num_fc-1}, out_ref
    """
    fc_refs = rest[:2 * num_fc]
    o_ref = rest[2 * num_fc]

    BT = B * T
    C = w_ref.shape[-1]
    x = x_ref[...].astype(compute_dtype)                 # (B*T + max_fs - 1, E)

    # Conv for all branches & all batch rows: one MXU matmul per filter offset.
    acc = jnp.zeros((BT, C), jnp.float32)
    for k in range(max_fs):
        acc = acc + jnp.dot(x[k:k + BT, :],
                            w_ref[k].astype(compute_dtype),
                            preferred_element_type=jnp.float32)
    acc = jnp.maximum(acc + b_ref[...], 0.0)             # bias + ReLU, once

    # Per-phrase max-pool over time.  Invalid window starts (straddling the
    # next phrase / zero padding; per-branch length T-fs+1) are masked to 0,
    # which cannot affect the max of the non-negative post-ReLU values.
    # Dropout is identity in eval mode.
    acc3 = acc.reshape(B, T, C) * mask_ref[...][None, :, :]
    h = jnp.max(acc3, axis=1)                            # (B, C_total), in regs

    # Fully-connected stack (ReLU + dropout=id on all but the last layer).
    for j in range(num_fc):
        wj, bj = fc_refs[2 * j], fc_refs[2 * j + 1]
        h = jnp.dot(h.astype(compute_dtype), wj[...].astype(compute_dtype),
                    preferred_element_type=jnp.float32) + bj[...]
        if j < num_fc - 1:
            h = jnp.maximum(h, 0.0)
    o_ref[...] = h.astype(o_ref.dtype)                   # single logits store


def cnn_classifier_forward(input_vectors, conv_params, fc_params,
                           *, compute_dtype=jnp.float32):
    """input_vectors: (B, T, E) already-embedded phrases (f32).

    conv_params: list of (filter_size, weight (fs, E, C), bias (1, C))
    fc_params:   list of (weight (in, out), bias (1, out))
    """
    B, T, E = input_vectors.shape
    filter_sizes = tuple(fs for (fs, _, _) in conv_params)
    max_fs = max(filter_sizes)
    channels = [w.shape[-1] for (_, w, _) in conv_params]
    total_c = sum(channels)
    num_fc = len(fc_params)
    num_classes = fc_params[-1][0].shape[1]

    # ---- wrapper-side packing: pure layout plumbing (pack once at init in
    # production), no compute hoisted out of the kernel. ----
    x2d = input_vectors.reshape(B * T, E)
    if max_fs > 1:
        x2d = jnp.concatenate(
            [x2d, jnp.zeros((max_fs - 1, E), x2d.dtype)], axis=0)

    w_all = jnp.zeros((max_fs, E, total_c), jnp.float32)
    b_all = jnp.zeros((1, total_c), jnp.float32)
    mask = jnp.zeros((T, total_c), jnp.float32)
    col = 0
    for (fs, w, b), C in zip(conv_params, channels):
        w_all = w_all.at[:fs, :, col:col + C].set(w)
        b_all = b_all.at[:, col:col + C].set(b)
        mask = mask.at[:T - fs + 1, col:col + C].set(1.0)   # valid window starts
        col += C

    flat_fc = []
    for (w, b) in fc_params:
        flat_fc += [w, b]

    kernel = functools.partial(
        fused_cnn_kernel, B=B, T=T, max_fs=max_fs, num_fc=num_fc,
        compute_dtype=compute_dtype)

    return pl.pallas_call(
        kernel,
        out_shape=jax.ShapeDtypeStruct((B, num_classes), jnp.float32),
        in_specs=[_vmem_spec()] * (4 + len(flat_fc)),
        out_specs=_vmem_spec(),
    )(x2d, w_all, b_all, mask, *flat_fc)


def _reference_forward(x, conv_params, fc_params):
    """Plain-JAX reference matching the PyTorch forward (eval mode)."""
    B, T, _ = x.shape
    pooled = []
    for (fs, w, b) in conv_params:
        L = T - fs + 1
        acc = jnp.zeros((B, L, w.shape[-1]), jnp.float32)
        for k in range(fs):
            acc = acc + jnp.einsum('ble,ec->blc', x[:, k:k + L, :], w[k])
        acc = jnp.maximum(acc + b[None], 0.0)
        pooled.append(jnp.max(acc, axis=1))
    h = jnp.concatenate(pooled, axis=1)
    for (w, b) in fc_params[:-1]:
        h = jnp.maximum(h @ w + b, 0.0)
    w, b = fc_params[-1]
    return h @ w + b


if __name__ == "__main__":
    # ----- deterministic synthetic config / parameters -----
    key = jax.random.PRNGKey(0)
    keys = jax.random.split(key, 12)

    vocab_size, emb_dim = 50, 32
    filter_channels = 8
    filter_sizes = (2, 3)
    fc_shapes = (16,)
    num_classes = 3
    B, T = 2, 8                      # T >= max(filter_sizes)
    PAD_ID = 0

    emb_matrix = jax.random.normal(keys[0], (vocab_size, emb_dim), jnp.float32) * 0.1
    unk = (jax.random.normal(keys[1], (emb_dim,), jnp.float32)
           / jnp.sqrt(emb_dim) / 10.0)

    conv_params = []
    for i, fs in enumerate(filter_sizes):
        w = jax.random.normal(keys[2 + i], (fs, emb_dim, filter_channels),
                              jnp.float32) * 0.1
        b = jax.random.normal(keys[4 + i], (1, filter_channels), jnp.float32) * 0.01
        conv_params.append((fs, w, b))

    fc_params = []
    prev = len(filter_sizes) * filter_channels
    for i, size in enumerate(list(fc_shapes) + [num_classes]):
        w = jax.random.normal(keys[6 + 2 * i], (prev, size), jnp.float32) * 0.1
        b = jax.random.normal(keys[7 + 2 * i], (1, size), jnp.float32) * 0.01
        fc_params.append((w, b))
        prev = size

    # ----- glue: token indices -> embedded vectors (padding + unk handling) -----
    # TODO(synk): string vocab lookup, word normalization ('-' stripping, trailing
    # apostrophe), Python random pad offsets and 1% train-time UNK replacement
    # have no Pallas equivalent; indices and unknown positions supplied directly.
    batch_indices = jnp.array([[3, 7, 11, 19, 23, 5, 2, 9],
                               [4, 8, 15, 16, 42, 6, PAD_ID, PAD_ID]], jnp.int32)
    unknown_mask = jnp.array([[0, 0, 0, 0, 0, 0, 0, 0],
                              [0, 0, 0, 1, 0, 0, 0, 0]], jnp.bool_)

    input_vectors = jnp.take(emb_matrix, batch_indices, axis=0)       # (B, T, E)
    input_vectors = jnp.where(unknown_mask[:, :, None],
                              unk[None, None, :], input_vectors)

    # ----- run fused kernel -----
    out = cnn_classifier_forward(input_vectors, conv_params, fc_params)
    out = jax.block_until_ready(out)
    assert out.shape == (B, num_classes)
    assert out.dtype == jnp.float32

    # numerical check against plain-JAX reference of the PyTorch forward
    ref = jax.block_until_ready(
        _reference_forward(input_vectors, conv_params, fc_params))
    assert jnp.allclose(out, ref, rtol=1e-4, atol=1e-4)

    print("KERNEL_OK")
</pallas_src>

<mosaic_0001>
module attributes {stable_mosaic.version = 11 : i64} {
  func.func @fused_cnn_kernel(%arg0: memref<18x32xf32, #tpu.memory_space<vmem>>, %arg1: memref<3x32x16xf32, #tpu.memory_space<vmem>>, %arg2: memref<1x16xf32, #tpu.memory_space<vmem>>, %arg3: memref<8x16xf32, #tpu.memory_space<vmem>>, %arg4: memref<16x16xf32, #tpu.memory_space<vmem>>, %arg5: memref<1x16xf32, #tpu.memory_space<vmem>>, %arg6: memref<16x3xf32, #tpu.memory_space<vmem>>, %arg7: memref<1x3xf32, #tpu.memory_space<vmem>>, %arg8: memref<2x3xf32, #tpu.memory_space<vmem>>) attributes {dimension_semantics = [], scalar_prefetch = 0 : i64, scratch_operands = 0 : i64, tpu.core_type = #tpu.core_type<tc>} {
    %c0 = arith.constant 0 : index
    %c0_0 = arith.constant 0 : index
    %0 = vector.load %arg0[%c0, %c0_0] : memref<18x32xf32, #tpu.memory_space<vmem>>, vector<18x32xf32>
    %cst = arith.constant 0.000000e+00 : f32
    %1 = vector.broadcast %cst : f32 to vector<16x16xf32>
    %2 = vector.extract_strided_slice %0 {offsets = [0, 0], sizes = [16, 32], strides = [1, 1]} : vector<18x32xf32> to vector<16x32xf32>
    %c0_1 = arith.constant 0 : index
    %c0_2 = arith.constant 0 : index
    %c0_3 = arith.constant 0 : index
    %3 = vector.load %arg1[%c0_1, %c0_2, %c0_3] : memref<3x32x16xf32, #tpu.memory_space<vmem>>, vector<1x32x16xf32>
    %4 = vector.shape_cast %3 : vector<1x32x16xf32> to vector<32x16xf32>
    %cst_4 = arith.constant dense<0.000000e+00> : vector<16x16xf32>
    %5 = tpu.matmul %2, %4, %cst_4 {dimension_numbers = #tpu.dot_dimension_numbers<[1], [0], [0], [1], [0, 0, 1, 1], [], []>} : vector<16x32xf32>, vector<32x16xf32>, vector<16x16xf32> -> vector<16x16xf32>
    %6 = arith.addf %1, %5 : vector<16x16xf32>
    %7 = vector.extract_strided_slice %0 {offsets = [1, 0], sizes = [16, 32], strides = [1, 1]} : vector<18x32xf32> to vector<16x32xf32>
    %c1 = arith.constant 1 : index
    %c0_5 = arith.constant 0 : index
    %c0_6 = arith.constant 0 : index
    %8 = vector.load %arg1[%c1, %c0_5, %c0_6] : memref<3x32x16xf32, #tpu.memory_space<vmem>>, vector<1x32x16xf32>
    %9 = vector.shape_cast %8 : vector<1x32x16xf32> to vector<32x16xf32>
    %cst_7 = arith.constant dense<0.000000e+00> : vector<16x16xf32>
    %10 = tpu.matmul %7, %9, %cst_7 {dimension_numbers = #tpu.dot_dimension_numbers<[1], [0], [0], [1], [0, 0, 1, 1], [], []>} : vector<16x32xf32>, vector<32x16xf32>, vector<16x16xf32> -> vector<16x16xf32>
    %11 = arith.addf %6, %10 : vector<16x16xf32>
    %12 = vector.extract_strided_slice %0 {offsets = [2, 0], sizes = [16, 32], strides = [1, 1]} : vector<18x32xf32> to vector<16x32xf32>
    %c2 = arith.constant 2 : index
    %c0_8 = arith.constant 0 : index
    %c0_9 = arith.constant 0 : index
    %13 = vector.load %arg1[%c2, %c0_8, %c0_9] : memref<3x32x16xf32, #tpu.memory_space<vmem>>, vector<1x32x16xf32>
    %14 = vector.shape_cast %13 : vector<1x32x16xf32> to vector<32x16xf32>
    %cst_10 = arith.constant dense<0.000000e+00> : vector<16x16xf32>
    %15 = tpu.matmul %12, %14, %cst_10 {dimension_numbers = #tpu.dot_dimension_numbers<[1], [0], [0], [1], [0, 0, 1, 1], [], []>} : vector<16x32xf32>, vector<32x16xf32>, vector<16x16xf32> -> vector<16x16xf32>
    %16 = arith.addf %11, %15 : vector<16x16xf32>
    %c0_11 = arith.constant 0 : index
    %c0_12 = arith.constant 0 : index
    %17 = vector.load %arg2[%c0_11, %c0_12] : memref<1x16xf32, #tpu.memory_space<vmem>>, vector<1x16xf32>
    %18 = vector.broadcast %17 : vector<1x16xf32> to vector<16x16xf32>
    %19 = arith.addf %16, %18 : vector<16x16xf32>
    %cst_13 = arith.constant 0.000000e+00 : f32
    %20 = vector.broadcast %cst_13 : f32 to vector<16x16xf32>
    %21 = arith.maximumf %19, %20 : vector<16x16xf32>
    %22 = vector.shape_cast %21 : vector<16x16xf32> to vector<2x8x16xf32>
    %c0_14 = arith.constant 0 : index
    %c0_15 = arith.constant 0 : index
    %23 = vector.load %arg3[%c0_14, %c0_15] : memref<8x16xf32, #tpu.memory_space<vmem>>, vector<8x16xf32>
    %24 = vector.shape_cast %23 : vector<8x16xf32> to vector<1x8x16xf32>
    %25 = vector.broadcast %24 : vector<1x8x16xf32> to vector<2x8x16xf32>
    %26 = arith.mulf %22, %25 : vector<2x8x16xf32>
    %cst_16 = arith.constant dense<0xFF800000> : vector<2x16xf32>
    %27 = vector.multi_reduction <maximumf>, %26, %cst_16 [1] : vector<2x8x16xf32> to vector<2x16xf32>
    %c0_17 = arith.constant 0 : index
    %c0_18 = arith.constant 0 : index
    %28 = vector.load %arg4[%c0_17, %c0_18] : memref<16x16xf32, #tpu.memory_space<vmem>>, vector<16x16xf32>
    %cst_19 = arith.constant dense<0.000000e+00> : vector<2x16xf32>
    %29 = tpu.matmul %27, %28, %cst_19 {dimension_numbers = #tpu.dot_dimension_numbers<[1], [0], [0], [1], [0, 0, 1, 1], [], []>} : vector<2x16xf32>, vector<16x16xf32>, vector<2x16xf32> -> vector<2x16xf32>
    %c0_20 = arith.constant 0 : index
    %c0_21 = arith.constant 0 : index
    %30 = vector.load %arg5[%c0_20, %c0_21] : memref<1x16xf32, #tpu.memory_space<vmem>>, vector<1x16xf32>
    %31 = vector.broadcast %30 : vector<1x16xf32> to vector<2x16xf32>
    %32 = arith.addf %29, %31 : vector<2x16xf32>
    %cst_22 = arith.constant 0.000000e+00 : f32
    %33 = vector.broadcast %cst_22 : f32 to vector<2x16xf32>
    %34 = arith.maximumf %32, %33 : vector<2x16xf32>
    %c0_23 = arith.constant 0 : index
    %c0_24 = arith.constant 0 : index
    %35 = vector.load %arg6[%c0_23, %c0_24] : memref<16x3xf32, #tpu.memory_space<vmem>>, vector<16x3xf32>
    %cst_25 = arith.constant dense<0.000000e+00> : vector<2x3xf32>
    %36 = tpu.matmul %34, %35, %cst_25 {dimension_numbers = #tpu.dot_dimension_numbers<[1], [0], [0], [1], [0, 0, 1, 1], [], []>} : vector<2x16xf32>, vector<16x3xf32>, vector<2x3xf32> -> vector<2x3xf32>
    %c0_26 = arith.constant 0 : index
    %c0_27 = arith.constant 0 : index
    %37 = vector.load %arg7[%c0_26, %c0_27] : memref<1x3xf32, #tpu.memory_space<vmem>>, vector<1x3xf32>
    %38 = vector.broadcast %37 : vector<1x3xf32> to vector<2x3xf32>
    %39 = arith.addf %36, %38 : vector<2x3xf32>
    %c0_28 = arith.constant 0 : index
    %c0_29 = arith.constant 0 : index
    %40 = vector.load %arg8[%c0_28, %c0_29] : memref<2x3xf32, #tpu.memory_space<vmem>>, vector<2x3xf32>
    tpu.vector_store %arg8[%c0_28, %c0_29], %39 {strides = array<i32>} : memref<2x3xf32, #tpu.memory_space<vmem>>, vector<2x3xf32>,
    return
  }
}

</mosaic_0001>

<llo_original>
// kernel: tpu_custom_call.1
$region0: #{tpu_custom_call.1}
  #allocation0 [shape = 'u32[]', space=smem, size = 0x4, offset = 0x4, fixed_abs, tag = 'smem constant byte address 0x4 - core index']
  #allocation1 [shape = 'u32[144,128]{1,0:T(1,128)}', space=vmem, size = 0x12000, scoped, tag = 'internal scratch']
  %s0 = inlined_call_operand.vmem [shape: f32[18,32], index: 0, kind: input, shape index: {}]
  %s1 = inlined_call_operand.vmem [shape: f32[3,32,16], index: 1, kind: input, shape index: {}]
  %s2 = inlined_call_operand.vmem [shape: f32[1,16], index: 2, kind: input, shape index: {}]
  %s3 = inlined_call_operand.vmem [shape: f32[8,16], index: 3, kind: input, shape index: {}]
  %s4 = inlined_call_operand.vmem [shape: f32[16,16], index: 4, kind: input, shape index: {}]
  %s5 = inlined_call_operand.vmem [shape: f32[1,16], index: 5, kind: input, shape index: {}]
  %s6 = inlined_call_operand.vmem [shape: f32[16,3], index: 6, kind: input, shape index: {}]
  %s7 = inlined_call_operand.vmem [shape: f32[1,3], index: 7, kind: input, shape index: {}]
  %s8 = inlined_call_operand.hbm [shape: f32[2,3], index: 8, kind: output, shape index: {}]
  %s9 = sld [smem:[#allocation0]]
  $region42: #{tpu_custom_call.1} parent=0
    _
  %s11 = ssub.s32 1, %s9
  %s12 = scalar_select 0, %s11, %s9
  $region1: #{tpu_custom_call.1} parent=0
    #allocation2 [shape = 'u8[1024]{0}', space=vmem, size = 0x400, scoped, tag = 'output window, operand 0, single buffered']
    #allocation3 [shape = 's32[1]{0}', space=sflag, size = 0x4, scoped, tag = 'scoped memory for tpu_custom_call.1']
    %13 = vsyncpa [#allocation3], 0
    // Predicated region
    $region2: #{tpu_custom_call.1} parent=1 // pred_check
      _
    $region3: #{tpu_custom_call.1} parent=1 // pred_check_branch
      %15 = sbr.rel (0) target = $region5
    $region4: #{tpu_custom_call.1} parent=1 // pred_region
      _
    $region5: #{tpu_custom_call.1} parent=1 // pred_fallthru
      _
    // Predicated region
    $region6: #{tpu_custom_call.1} parent=1 // pred_check
      _
    $region7: #{tpu_custom_call.1} parent=1 // pred_check_branch
      %17 = sbr.rel (0) target = $region9
    $region8: #{tpu_custom_call.1} parent=1 // pred_region
      _
    $region9: #{tpu_custom_call.1} parent=1 // pred_fallthru
      _
    // Predicated region
    $region10: #{tpu_custom_call.1} parent=1 // pred_check
      _
    $region11: #{tpu_custom_call.1} parent=1 // pred_check_branch
      %19 = sbr.rel (0) target = $region13
    $region12: #{tpu_custom_call.1} parent=1 // pred_region
      _
    $region13: #{tpu_custom_call.1} parent=1 // pred_fallthru
      _
    // Predicated region
    $region14: #{tpu_custom_call.1} parent=1 // pred_check
      _
    $region15: #{tpu_custom_call.1} parent=1 // pred_check_branch
      %21 = sbr.rel (0) target = $region17
    $region16: #{tpu_custom_call.1} parent=1 // pred_region
      _
    $region17: #{tpu_custom_call.1} parent=1 // pred_fallthru
      _
    // Predicated region
    $region18: #{tpu_custom_call.1} parent=1 // pred_check
      _
    $region19: #{tpu_custom_call.1} parent=1 // pred_check_branch
      %23 = sbr.rel (0) target = $region21
    $region20: #{tpu_custom_call.1} parent=1 // pred_region
      _
    $region21: #{tpu_custom_call.1} parent=1 // pred_fallthru
      _
    // Predicated region
    $region22: #{tpu_custom_call.1} parent=1 // pred_check
      _
    $region23: #{tpu_custom_call.1} parent=1 // pred_check_branch
      %25 = sbr.rel (0) target = $region25
    $region24: #{tpu_custom_call.1} parent=1 // pred_region
      _
    $region25: #{tpu_custom_call.1} parent=1 // pred_fallthru
      _
    // Predicated region
    $region26: #{tpu_custom_call.1} parent=1 // pred_check
      _
    $region27: #{tpu_custom_call.1} parent=1 // pred_check_branch
      %27 = sbr.rel (0) target = $region29
    $region28: #{tpu_custom_call.1} parent=1 // pred_region
      _
    $region29: #{tpu_custom_call.1} parent=1 // pred_fallthru
      _
    // Predicated region
    $region30: #{tpu_custom_call.1} parent=1 // pred_check
      _
    $region31: #{tpu_custom_call.1} parent=1 // pred_check_branch
      %29 = sbr.rel (0) target = $region33
    $region32: #{tpu_custom_call.1} parent=1 // pred_region
      _
    $region33: #{tpu_custom_call.1} parent=1 // pred_fallthru
      _
    %v30 = vld [vmem:[%s0] sm:$0xff]
    %v31 = vld [vmem:[%s0 + $0x8] sm:$0xff]
    %v32 = vld [vmem:[%s0 + $0x10] sm:$0x3]
    %v33 = vld [vmem:[%s1] sm:$0xff]
    %v34 = vld [vmem:[%s1 + $0x8] sm:$0xff]
    %v35 = vld [vmem:[%s1 + $0x10] sm:$0xff]
    %v36 = vld [vmem:[%s1 + $0x18] sm:$0xff]
    %s37 = scalar_lea.vmem %s1, 32
    %v38 = vld [vmem:[%s37] sm:$0xff]
    %v39 = vld [vmem:[%s37 + $0x8] sm:$0xff]
    %v40 = vld [vmem:[%s37 + $0x10] sm:$0xff]
    %v41 = vld [vmem:[%s37 + $0x18] sm:$0xff]
    %vm45 = vcmask 1046528
    %v46 = vrot.slane %v30, 1
    %v47 = vrot.slane %v31, 1
    %v48 = vsel %vm45, %v46, %v47
    %v49 = vrot.slane %v32, 1
    %v50 = vsel %vm45, %v47, %v49
    %vm51 = vcmask 261120
    %v52 = vsel %vm51, %v48, 0
    %v54 = vsel %vm51, %v50, 0
    %56 = vmatprep.subr.mxu0 0.0
    %57 = vmatpush1.msra.mxu0 %v38
    %58 = vmatprep.subr.mxu0 0.0
    %59 = vmatpush1.msra.mxu0 %v39
    %60 = vmatprep.subr.mxu0 0.0
    %61 = vmatpush1.msra.mxu0 %v40
    %62 = vmatprep.subr.mxu0 0.0
    %63 = vmatpush1.msra.mxu0 %v41
    %64 = vmatprep.subr.mxu0 0.0
    %65 = vmatpush1.msra.mxu0 0.0
    %66 = vmatprep.subr.mxu0 0.0
    %67 = vmatpush1.msra.mxu0 0.0
    %68 = vmatprep.subr.mxu0 0.0
    %69 = vmatpush1.msra.mxu0 0.0
    %70 = vmatprep.subr.mxu0 0.0
    %71 = vmatpush1.msra.mxu0 0.0
    %72 = vmatprep.subr.mxu0 0.0
    %73 = vmatpush1.msra.mxu0 0.0
    %74 = vmatprep.subr.mxu0 0.0
    %75 = vmatpush1.msra.mxu0 0.0
    %76 = vmatprep.subr.mxu0 0.0
    %77 = vmatpush1.msra.mxu0 0.0
    %78 = vmatprep.subr.mxu0 0.0
    %79 = vmatpush1.msra.mxu0 0.0
    %80 = vmatprep.subr.mxu0 0.0
    %81 = vmatpush1.msra.mxu0 0.0
    %82 = vmatprep.subr.mxu0 0.0
    %83 = vmatpush1.msra.mxu0 0.0
    %84 = vmatprep.subr.mxu0 0.0
    %85 = vmatpush1.msra.mxu0 0.0
    %86 = vmatprep.subr.mxu0 0.0
    %87 = vmatpush1.msra.mxu0 0.0
    %88 = vmatprep.subr.mxu0 0.0
    %89 = vmatpush1.msra.mxu0 0.0
    %90 = vmatprep.subr.mxu0 0.0
    %91 = vmatpush1.msra.mxu0 0.0
    %92 = vmatprep.subr.mxu0 0.0
    %93 = vmatpush1.msra.mxu0 0.0
    %94 = vmatprep.subr.mxu0 0.0
    %95 = vmatpush1.msra.mxu0 0.0
    %96 = vmatprep.subr.mxu0 0.0
    %97 = vmatpush1.msra.mxu0 0.0
    %98 = vmatprep.subr.mxu0 0.0
    %99 = vmatpush1.msra.mxu0 0.0
    %100 = vmatprep.subr.mxu0 0.0
    %101 = vmatpush1.msra.mxu0 0.0
    %102 = vmatprep.subr.mxu0 0.0
    %103 = vmatpush1.msra.mxu0 0.0
    %104 = vmatprep.subr.mxu0 0.0
    %105 = vmatpush1.msra.mxu0 0.0
    %106 = vmatprep.subr.mxu0 0.0
    %107 = vmatpush1.msra.mxu0 0.0
    %108 = vmatprep.subr.mxu0 0.0
    %109 = vmatpush1.msra.mxu0 0.0
    %110 = vmatprep.subr.mxu0 0.0
    %111 = vmatpush1.msra.mxu0 0.0
    %112 = vmatprep.subr.mxu0 0.0
    %113 = vmatpush1.msra.mxu0 0.0
    %114 = vmatprep.subr.mxu0 0.0
    %115 = vmatpush1.msra.mxu0 0.0
    %116 = vmatprep.subr.mxu0 0.0
    %117 = vmatpush1.msra.mxu0 0.0
    %118 = vmatprep.subr.mxu0 0.0
    %119 = vmatpush1.msra.mxu0 0.0
    %120 = vmatprep.mubr.f32.mxu0 0.0
    %121 = vmatmul.mubr.f32.gmra.mrb[0].mxu0 %v52
    %v122 = vpop.f32.mrb[0].mxu0
    %v123 = vadd.f32 0.0, %v122
    %v124 = vpop.f32.mrb[0].mxu0
    %125 = vmatprep.mubr.f32.mxu0 0.0
    %126 = vmatmul.mubr.f32.gmra.mrb[0].mxu0 %v54
    %v127 = vpop.f32.mrb[0].mxu0
    %v128 = vadd.f32 0.0, %v127
    %v129 = vpop.f32.mrb[0].mxu0
    %130 = vdwg.mxu0
    %v131 = vsel %vm51, %v30, 0
    %v133 = vsel %vm51, %v31, 0
    %135 = vmatprep.subr.mxu0 0.0
    %136 = vmatpush1.msra.mxu0 %v33
    %137 = vmatprep.subr.mxu0 0.0
    %138 = vmatpush1.msra.mxu0 %v34
    %139 = vmatprep.subr.mxu0 0.0
    %140 = vmatpush1.msra.mxu0 %v35
    %141 = vmatprep.subr.mxu0 0.0
    %142 = vmatpush1.msra.mxu0 %v36
    %143 = vmatprep.subr.mxu0 0.0
    %144 = vmatpush1.msra.mxu0 0.0
    %145 = vmatprep.subr.mxu0 0.0
    %146 = vmatpush1.msra.mxu0 0.0
    %147 = vmatprep.subr.mxu0 0.0
    %148 = vmatpush1.msra.mxu0 0.0
    %149 = vmatprep.subr.mxu0 0.0
    %150 = vmatpush1.msra.mxu0 0.0
    %151 = vmatprep.subr.mxu0 0.0
    %152 = vmatpush1.msra.mxu0 0.0
    %153 = vmatprep.subr.mxu0 0.0
    %154 = vmatpush1.msra.mxu0 0.0
    %155 = vmatprep.subr.mxu0 0.0
    %156 = vmatpush1.msra.mxu0 0.0
    %157 = vmatprep.subr.mxu0 0.0
    %158 = vmatpush1.msra.mxu0 0.0
    %159 = vmatprep.subr.mxu0 0.0
    %160 = vmatpush1.msra.mxu0 0.0
    %161 = vmatprep.subr.mxu0 0.0
    %162 = vmatpush1.msra.mxu0 0.0
    %163 = vmatprep.subr.mxu0 0.0
    %164 = vmatpush1.msra.mxu0 0.0
    %165 = vmatprep.subr.mxu0 0.0
    %166 = vmatpush1.msra.mxu0 0.0
    %167 = vmatprep.subr.mxu0 0.0
    %168 = vmatpush1.msra.mxu0 0.0
    %169 = vmatprep.subr.mxu0 0.0
    %170 = vmatpush1.msra.mxu0 0.0
    %171 = vmatprep.subr.mxu0 0.0
    %172 = vmatpush1.msra.mxu0 0.0
    %173 = vmatprep.subr.mxu0 0.0
    %174 = vmatpush1.msra.mxu0 0.0
    %175 = vmatprep.subr.mxu0 0.0
    %176 = vmatpush1.msra.mxu0 0.0
    %177 = vmatprep.subr.mxu0 0.0
    %178 = vmatpush1.msra.mxu0 0.0
    %179 = vmatprep.subr.mxu0 0.0
    %180 = vmatpush1.msra.mxu0 0.0
    %181 = vmatprep.subr.mxu0 0.0
    %182 = vmatpush1.msra.mxu0 0.0
    %183 = vmatprep.subr.mxu0 0.0
    %184 = vmatpush1.msra.mxu0 0.0
    %185 = vmatprep.subr.mxu0 0.0
    %186 = vmatpush1.msra.mxu0 0.0
    %187 = vmatprep.subr.mxu0 0.0
    %188 = vmatpush1.msra.mxu0 0.0
    %189 = vmatprep.subr.mxu0 0.0
    %190 = vmatpush1.msra.mxu0 0.0
    %191 = vmatprep.subr.mxu0 0.0
    %192 = vmatpush1.msra.mxu0 0.0
    %193 = vmatprep.subr.mxu0 0.0
    %194 = vmatpush1.msra.mxu0 0.0
    %195 = vmatprep.subr.mxu0 0.0
    %196 = vmatpush1.msra.mxu0 0.0
    %197 = vmatprep.subr.mxu0 0.0
    %198 = vmatpush1.msra.mxu0 0.0
    %199 = vmatprep.mubr.f32.mxu0 0.0
    %200 = vmatmul.mubr.f32.gmra.mrb[0].mxu0 %v131
    %v201 = vpop.f32.mrb[0].mxu0
    %v202 = vadd.f32 %v123, %v201
    %v203 = vpop.f32.mrb[0].mxu0
    %204 = vmatprep.mubr.f32.mxu0 0.0
    %205 = vmatmul.mubr.f32.gmra.mrb[0].mxu0 %v133
    %v206 = vpop.f32.mrb[0].mxu0
    %v207 = vadd.f32 %v128, %v206
    %v208 = vpop.f32.mrb[0].mxu0
    %209 = vdwg.mxu0
    %s210 = scalar_lea.vmem %s1, 64
    %v211 = vld [vmem:[%s210] sm:$0xff]
    %v212 = vld [vmem:[%s210 + $0x8] sm:$0xff]
    %v213 = vld [vmem:[%s210 + $0x10] sm:$0xff]
    %v214 = vld [vmem:[%s210 + $0x18] sm:$0xff]
    %vm215 = vcmask 1045504
    %v216 = vrot.slane %v30, 2
    %v217 = vrot.slane %v31, 2
    %v218 = vsel %vm215, %v216, %v217
    %v219 = vrot.slane %v32, 2
    %v220 = vsel %vm215, %v217, %v219
    %v221 = vsel %vm51, %v218, 0
    %v223 = vsel %vm51, %v220, 0
    %225 = vmatprep.subr.mxu0 0.0
    %226 = vmatpush1.msra.mxu0 %v211
    %227 = vmatprep.subr.mxu0 0.0
    %228 = vmatpush1.msra.mxu0 %v212
    %229 = vmatprep.subr.mxu0 0.0
    %230 = vmatpush1.msra.mxu0 %v213
    %231 = vmatprep.subr.mxu0 0.0
    %232 = vmatpush1.msra.mxu0 %v214
    %233 = vmatprep.subr.mxu0 0.0
    %234 = vmatpush1.msra.mxu0 0.0
    %235 = vmatprep.subr.mxu0 0.0
    %236 = vmatpush1.msra.mxu0 0.0
    %237 = vmatprep.subr.mxu0 0.0
    %238 = vmatpush1.msra.mxu0 0.0
    %239 = vmatprep.subr.mxu0 0.0
    %240 = vmatpush1.msra.mxu0 0.0
    %241 = vmatprep.subr.mxu0 0.0
    %242 = vmatpush1.msra.mxu0 0.0
    %243 = vmatprep.subr.mxu0 0.0
    %244 = vmatpush1.msra.mxu0 0.0
    %245 = vmatprep.subr.mxu0 0.0
    %246 = vmatpush1.msra.mxu0 0.0
    %247 = vmatprep.subr.mxu0 0.0
    %248 = vmatpush1.msra.mxu0 0.0
    %249 = vmatprep.subr.mxu0 0.0
    %250 = vmatpush1.msra.mxu0 0.0
    %251 = vmatprep.subr.mxu0 0.0
    %252 = vmatpush1.msra.mxu0 0.0
    %253 = vmatprep.subr.mxu0 0.0
    %254 = vmatpush1.msra.mxu0 0.0
    %255 = vmatprep.subr.mxu0 0.0
    %256 = vmatpush1.msra.mxu0 0.0
    %257 = vmatprep.subr.mxu0 0.0
    %258 = vmatpush1.msra.mxu0 0.0
    %259 = vmatprep.subr.mxu0 0.0
    %260 = vmatpush1.msra.mxu0 0.0
    %261 = vmatprep.subr.mxu0 0.0
    %262 = vmatpush1.msra.mxu0 0.0
    %263 = vmatprep.subr.mxu0 0.0
    %264 = vmatpush1.msra.mxu0 0.0
    %265 = vmatprep.subr.mxu0 0.0
    %266 = vmatpush1.msra.mxu0 0.0
    %267 = vmatprep.subr.mxu0 0.0
    %268 = vmatpush1.msra.mxu0 0.0
    %269 = vmatprep.subr.mxu0 0.0
    %270 = vmatpush1.msra.mxu0 0.0
    %271 = vmatprep.subr.mxu0 0.0
    %272 = vmatpush1.msra.mxu0 0.0
    %273 = vmatprep.subr.mxu0 0.0
    %274 = vmatpush1.msra.mxu0 0.0
    %275 = vmatprep.subr.mxu0 0.0
    %276 = vmatpush1.msra.mxu0 0.0
    %277 = vmatprep.subr.mxu0 0.0
    %278 = vmatpush1.msra.mxu0 0.0
    %279 = vmatprep.subr.mxu0 0.0
    %280 = vmatpush1.msra.mxu0 0.0
    %281 = vmatprep.subr.mxu0 0.0
    %282 = vmatpush1.msra.mxu0 0.0
    %283 = vmatprep.subr.mxu0 0.0
    %284 = vmatpush1.msra.mxu0 0.0
    %285 = vmatprep.subr.mxu0 0.0
    %286 = vmatpush1.msra.mxu0 0.0
    %287 = vmatprep.subr.mxu0 0.0
    %288 = vmatpush1.msra.mxu0 0.0
    %289 = vmatprep.mubr.f32.mxu0 0.0
    %290 = vmatmul.mubr.f32.gmra.mrb[0].mxu0 %v221
    %v291 = vpop.f32.mrb[0].mxu0
    %v292 = vadd.f32 0.0, %v291
    %v293 = vpop.f32.mrb[0].mxu0
    %294 = vmatprep.mubr.f32.mxu0 0.0
    %295 = vmatmul.mubr.f32.gmra.mrb[0].mxu0 %v223
    %v296 = vpop.f32.mrb[0].mxu0
    %v297 = vadd.f32 0.0, %v296
    %v298 = vpop.f32.mrb[0].mxu0
    %299 = vdwg.mxu0
    %v300 = vadd.f32 %v202, %v292
    %v301 = vadd.f32 %v207, %v297
    %v302 = vld [vmem:[%s2] sm:$0x1]
    %v304 = vlaneseq
    %v305 = vshrl.u32 %v304, 7
    %v306 = vsub.s32 0, %v305
    %v307 = vrot.slane %v302, %v306
    %v309 = vadd.f32 %v300, %v307
    %v310 = vadd.f32 %v301, %v307
    %v311 = vmax.f32 %v309, 0.0
    %v312 = vmax.f32 %v310, 0.0
    %v313 = vld [vmem:[%s3] sm:$0xff]
    %v314 = vmul.f32 %v311, %v313
    %v315 = vmul.f32 %v312, %v313
    %vm316 = vcmask 130048
    %v317 = vsel %vm316, %v314, -inf
    %v318 = vrot.slane %v317, 4
    %v319 = vmax.f32 %v317, %v318
    %v320 = vrot.slane %v319, 2
    %v321 = vmax.f32 %v319, %v320
    %v322 = vrot.slane %v321, 1
    %v323 = vmax.f32 %v321, %v322
    %v324 = vsel %vm316, %v315, -inf
    %v325 = vrot.slane %v324, 4
    %v326 = vmax.f32 %v324, %v325
    %v327 = vrot.slane %v326, 2
    %v328 = vmax.f32 %v326, %v327
    %v329 = vrot.slane %v328, 1
    %v330 = vmax.f32 %v328, %v329
    %v331 = vld [vmem:[%s4] sm:$0xff]
    %v332 = vld [vmem:[%s4 + $0x8] sm:$0xff]
    %v333 = vld [vmem:[%s5] sm:$0x1]
    %v335 = vlaneseq
    %v336 = vshrl.u32 %v335, 7
    %v337 = vsub.s32 0, %v336
    %v338 = vrot.slane %v333, %v337
    %vm342 = vcmask 1041409
    %v343 = vsel %vm342, %v330, %v323
    %v344 = vsel %vm316, %v343, 0
    %346 = vmatprep.subr.mxu0 0.0
    %347 = vmatpush1.msra.mxu0 %v331
    %348 = vmatprep.subr.mxu0 0.0
    %349 = vmatpush1.msra.mxu0 %v332
    %350 = vmatprep.subr.mxu0 0.0
    %351 = vmatpush1.msra.mxu0 0.0
    %352 = vmatprep.subr.mxu0 0.0
    %353 = vmatpush1.msra.mxu0 0.0
    %354 = vmatprep.subr.mxu0 0.0
    %355 = vmatpush1.msra.mxu0 0.0
    %356 = vmatprep.subr.mxu0 0.0
    %357 = vmatpush1.msra.mxu0 0.0
    %358 = vmatprep.subr.mxu0 0.0
    %359 = vmatpush1.msra.mxu0 0.0
    %360 = vmatprep.subr.mxu0 0.0
    %361 = vmatpush1.msra.mxu0 0.0
    %362 = vmatprep.subr.mxu0 0.0
    %363 = vmatpush1.msra.mxu0 0.0
    %364 = vmatprep.subr.mxu0 0.0
    %365 = vmatpush1.msra.mxu0 0.0
    %366 = vmatprep.subr.mxu0 0.0
    %367 = vmatpush1.msra.mxu0 0.0
    %368 = vmatprep.subr.mxu0 0.0
    %369 = vmatpush1.msra.mxu0 0.0
    %370 = vmatprep.subr.mxu0 0.0
    %371 = vmatpush1.msra.mxu0 0.0
    %372 = vmatprep.subr.mxu0 0.0
    %373 = vmatpush1.msra.mxu0 0.0
    %374 = vmatprep.subr.mxu0 0.0
    %375 = vmatpush1.msra.mxu0 0.0
    %376 = vmatprep.subr.mxu0 0.0
    %377 = vmatpush1.msra.mxu0 0.0
    %378 = vmatprep.subr.mxu0 0.0
    %379 = vmatpush1.msra.mxu0 0.0
    %380 = vmatprep.subr.mxu0 0.0
    %381 = vmatpush1.msra.mxu0 0.0
    %382 = vmatprep.subr.mxu0 0.0
    %383 = vmatpush1.msra.mxu0 0.0
    %384 = vmatprep.subr.mxu0 0.0
    %385 = vmatpush1.msra.mxu0 0.0
    %386 = vmatprep.subr.mxu0 0.0
    %387 = vmatpush1.msra.mxu0 0.0
    %388 = vmatprep.subr.mxu0 0.0
    %389 = vmatpush1.msra.mxu0 0.0
    %390 = vmatprep.subr.mxu0 0.0
    %391 = vmatpush1.msra.mxu0 0.0
    %392 = vmatprep.subr.mxu0 0.0
    %393 = vmatpush1.msra.mxu0 0.0
    %394 = vmatprep.subr.mxu0 0.0
    %395 = vmatpush1.msra.mxu0 0.0
    %396 = vmatprep.subr.mxu0 0.0
    %397 = vmatpush1.msra.mxu0 0.0
    %398 = vmatprep.subr.mxu0 0.0
    %399 = vmatpush1.msra.mxu0 0.0
    %400 = vmatprep.subr.mxu0 0.0
    %401 = vmatpush1.msra.mxu0 0.0
    %402 = vmatprep.subr.mxu0 0.0
    %403 = vmatpush1.msra.mxu0 0.0
    %404 = vmatprep.subr.mxu0 0.0
    %405 = vmatpush1.msra.mxu0 0.0
    %406 = vmatprep.subr.mxu0 0.0
    %407 = vmatpush1.msra.mxu0 0.0
    %408 = vmatprep.subr.mxu0 0.0
    %409 = vmatpush1.msra.mxu0 0.0
    %410 = vmatprep.mubr.f32.mxu0 0.0
    %411 = vmatmul.mubr.f32.gmra.mrb[0].mxu0 %v344
    %v412 = vpop.f32.mrb[0].mxu0
    %v413 = vadd.f32 %v338, %v412
    %v414 = vpop.f32.mrb[0].mxu0
    %415 = vdwg.mxu0
    %v416 = vmax.f32 %v413, 0.0
    %v417 = vld [vmem:[%s6] sm:$0xff]
    %v418 = vld [vmem:[%s6 + $0x8] sm:$0xff]
    %v419 = vld [vmem:[%s7] sm:$0x1]
    %v421 = vlaneseq
    %v422 = vshrl.u32 %v421, 7
    %v423 = vsub.s32 0, %v422
    %v424 = vrot.slane %v419, %v423
    %v427 = vsel %vm316, %v416, 0
    %429 = vmatprep.subr.mxu0 0.0
    %430 = vmatpush1.msra.mxu0 %v417
    %431 = vmatprep.subr.mxu0 0.0
    %432 = vmatpush1.msra.mxu0 %v418
    %433 = vmatprep.subr.mxu0 0.0
    %434 = vmatpush1.msra.mxu0 0.0
    %435 = vmatprep.subr.mxu0 0.0
    %436 = vmatpush1.msra.mxu0 0.0
    %437 = vmatprep.subr.mxu0 0.0
    %438 = vmatpush1.msra.mxu0 0.0
    %439 = vmatprep.subr.mxu0 0.0
    %440 = vmatpush1.msra.mxu0 0.0
    %441 = vmatprep.subr.mxu0 0.0
    %442 = vmatpush1.msra.mxu0 0.0
    %443 = vmatprep.subr.mxu0 0.0
    %444 = vmatpush1.msra.mxu0 0.0
    %445 = vmatprep.subr.mxu0 0.0
    %446 = vmatpush1.msra.mxu0 0.0
    %447 = vmatprep.subr.mxu0 0.0
    %448 = vmatpush1.msra.mxu0 0.0
    %449 = vmatprep.subr.mxu0 0.0
    %450 = vmatpush1.msra.mxu0 0.0
    %451 = vmatprep.subr.mxu0 0.0
    %452 = vmatpush1.msra.mxu0 0.0
    %453 = vmatprep.subr.mxu0 0.0
    %454 = vmatpush1.msra.mxu0 0.0
    %455 = vmatprep.subr.mxu0 0.0
    %456 = vmatpush1.msra.mxu0 0.0
    %457 = vmatprep.subr.mxu0 0.0
    %458 = vmatpush1.msra.mxu0 0.0
    %459 = vmatprep.subr.mxu0 0.0
    %460 = vmatpush1.msra.mxu0 0.0
    %461 = vmatprep.subr.mxu0 0.0
    %462 = vmatpush1.msra.mxu0 0.0
    %463 = vmatprep.subr.mxu0 0.0
    %464 = vmatpush1.msra.mxu0 0.0
    %465 = vmatprep.subr.mxu0 0.0
    %466 = vmatpush1.msra.mxu0 0.0
    %467 = vmatprep.subr.mxu0 0.0
    %468 = vmatpush1.msra.mxu0 0.0
    %469 = vmatprep.subr.mxu0 0.0
    %470 = vmatpush1.msra.mxu0 0.0
    %471 = vmatprep.subr.mxu0 0.0
    %472 = vmatpush1.msra.mxu0 0.0
    %473 = vmatprep.subr.mxu0 0.0
    %474 = vmatpush1.msra.mxu0 0.0
    %475 = vmatprep.subr.mxu0 0.0
    %476 = vmatpush1.msra.mxu0 0.0
    %477 = vmatprep.subr.mxu0 0.0
    %478 = vmatpush1.msra.mxu0 0.0
    %479 = vmatprep.subr.mxu0 0.0
    %480 = vmatpush1.msra.mxu0 0.0
    %481 = vmatprep.subr.mxu0 0.0
    %482 = vmatpush1.msra.mxu0 0.0
    %483 = vmatprep.subr.mxu0 0.0
    %484 = vmatpush1.msra.mxu0 0.0
    %485 = vmatprep.subr.mxu0 0.0
    %486 = vmatpush1.msra.mxu0 0.0
    %487 = vmatprep.subr.mxu0 0.0
    %488 = vmatpush1.msra.mxu0 0.0
    %489 = vmatprep.subr.mxu0 0.0
    %490 = vmatpush1.msra.mxu0 0.0
    %491 = vmatprep.subr.mxu0 0.0
    %492 = vmatpush1.msra.mxu0 0.0
    %493 = vmatprep.mubr.f32.mxu0 0.0
    %494 = vmatmul.mubr.f32.gmra.mrb[0].mxu0 %v427
    %v495 = vpop.f32.mrb[0].mxu0
    %v496 = vadd.f32 %v424, %v495
    %v497 = vpop.f32.mrb[0].mxu0
    %498 = vdwg.mxu0
    %vm499 = vcmask 17408
    %500 = vst.msk [vmem:[#allocation2] sm:$0x3] %vm499, %v496
    // Predicated region
    $region34: #{tpu_custom_call.1} parent=1 // pred_check
      _
    $region35: #{tpu_custom_call.1} parent=1 // pred_check_branch
      %502 = sbr.rel (0) target = $region37
    $region36: #{tpu_custom_call.1} parent=1 // pred_region
      %s504 = ssub.s32 32, 32
      %505 = vsyncadd [#allocation3], %s504
      %s507 = sshll.u32 [#allocation2], 4
      %s508 = int_to_ptr.vmem [resolvable:$true] %s507
      %510 = dma.vmem_to_hbm [thread:$0]  %s508, 32, %s8, [#allocation3]
    $region37: #{tpu_custom_call.1} parent=1 // pred_fallthru
      _
    // Predicated region
    $region38: #{tpu_custom_call.1} parent=1 // pred_check
      _
    $region39: #{tpu_custom_call.1} parent=1 // pred_check_branch
      %512 = sbr.rel (0) target = $region41
    $region40: #{tpu_custom_call.1} parent=1 // pred_region
      %513 = dma.done [#allocation3], 32
    $region41: #{tpu_custom_call.1} parent=1 // pred_fallthru
      _
    %514 = vsyncpa [#allocation3], 1

</llo_original>
